<compile_context>
chip_gen: v6e
topology: v6e:2x2x1
jax: 0.10.0
libtpu: 0.0.40
codegen_flags: <defaults>
</compile_context>

<pallas_src>
import jax
import jax.numpy as jnp
from jax import lax
from jax.experimental import pallas as pl
from jax.experimental.pallas import tpu as pltpu


_SQRT_HALF = 0.7071067811865476
_LN_EPS = 1e-5
# Working-set budget used to auto-size the batch tile.  Chosen to fit v7x's
# 64 MiB physical VMEM with headroom; conservative on v5e/v6e (128 MiB).
_VMEM_BUDGET = 40 * 1024 * 1024


def _round_up(v: int, m: int) -> int:
    return -(-v // m) * m


def _padded_tile_bytes(shape, dtype) -> int:
    """VMEM bytes for one buffer of `shape` after (sublane, lane) tile padding."""
    itemsize = jnp.dtype(dtype).itemsize
    sublane = 8 * max(1, 4 // itemsize)            # f32: 8, bf16: 16, int8: 32
    rows = _round_up(shape[-2], sublane) if len(shape) >= 2 else 1
    cols = _round_up(shape[-1], 128)
    lead = 1
    for d in shape[:-2]:
        lead *= int(d)
    return lead * rows * cols * itemsize


def _erf_poly(x):
    # Abramowitz & Stegun 7.1.26 rational approximation of erf, |err| <= 1.5e-7:
    # exact-erf GELU matches at fp32 well inside 1e-4.  Only exp / mul / add /
    # select / reciprocal are used so it lowers cleanly on Mosaic (VPU + EUP).
    a1, a2, a3, a4, a5 = (0.254829592, -0.284496736, 1.421413741,
                          -1.453152027, 1.061405429)
    p = 0.3275911
    ax = jnp.abs(x)
    # Divide issued as a reciprocal -> EUP slot instead of the VALU path.
    t = pl.reciprocal(1.0 + p * ax)
    poly = ((((a5 * t + a4) * t + a3) * t + a2) * t + a1) * t
    y = 1.0 - poly * jnp.exp(-ax * ax)
    return jnp.where(x >= 0.0, y, -y)


def _gelu_exact(x):
    # PyTorch F.gelu default ("none"): 0.5 * x * (1 + erf(x / sqrt(2)))
    return 0.5 * x * (1.0 + _erf_poly(x * _SQRT_HALF))


def _routing_kernel(mv_ref,                      # SMEM scalar prefetch: (1,) int32 max_visits
                    x_ref, vc_ref,               # (TB, Din) native dtype, (TB, E) int32
                    w1_ref, b1_ref,              # (Din, H), (1, H)     f32, resident
                    w2_ref, b2q_ref,             # (H, E+1), (1, E+1)   f32 (b2 + q folded)
                    g_ref, beta_ref,             # (1, E+1) LN affine
                    o_ref):                      # (TB, E+1) f32
    x = x_ref[...].astype(jnp.float32)

    # fc1 + exact GELU
    h = jnp.dot(x, w1_ref[...], preferred_element_type=jnp.float32) + b1_ref[...]
    h = _gelu_exact(h)

    # fc2 (+ q_values, already folded into the bias)
    z = jnp.dot(h, w2_ref[...], preferred_element_type=jnp.float32) + b2q_ref[...]

    # LayerNorm over the (num_experts + 1) axis — torch semantics
    # (biased variance, eps inside the sqrt, affine weight/bias), then clamp.
    mean = jnp.mean(z, axis=-1, keepdims=True)
    centered = z - mean
    var = jnp.mean(centered * centered, axis=-1, keepdims=True)
    y = centered * lax.rsqrt(var + _LN_EPS) * g_ref[...] + beta_ref[...]
    y = jnp.clip(y, -10.0, 10.0)

    # Full-width store, then overwrite only the expert columns (0..E-1) that are
    # exhausted with -inf.  The appended "terminate" column (index E) is never
    # touched by the partial store, i.e. never masked — same as torch's
    # cat([mask, zeros]) + masked_fill.
    o_ref[...] = y.astype(o_ref.dtype)
    E = vc_ref.shape[-1]
    masked = vc_ref[...] >= mv_ref[0]                        # int32 compare
    o_ref[:, :E] = jnp.where(masked, -jnp.inf, y[:, :E]).astype(o_ref.dtype)


def routing_controller_forward(x_summary, visit_counts, max_visits, params,
                               *, block_b: int = 1024):
    """Fused Pallas forward of RoutingController.

    x_summary:    (B, input_dim) float (streamed in its native dtype, e.g. bf16)
    visit_counts: (B, num_experts) integer visit counts
    max_visits:   python int
    params: torch-layout tensors:
        w1 (H, Din), b1 (H,), w2 (E+1, H), b2 (E+1,), q (E+1,),
        gamma (E+1,), beta (E+1,)
    Returns (B, num_experts + 1) float32 logits with -inf on exhausted experts.
    """
    B, d_in = x_summary.shape
    E = int(visit_counts.shape[-1])
    Eo = E + 1
    f32 = jnp.float32

    # Parameter glue: torch Linear stores (out, in); pre-transpose once so the
    # kernel runs plain x @ W on the MXU.  q_values folds into the fc2 bias.
    w1 = jnp.asarray(params["w1"], f32).T                        # (Din, H)
    b1 = jnp.asarray(params["b1"], f32).reshape(1, -1)           # (1, H)
    w2 = jnp.asarray(params["w2"], f32).T                        # (H, E+1)
    b2q = (jnp.asarray(params["b2"], f32)
           + jnp.asarray(params["q"], f32)).reshape(1, -1)       # (1, E+1)
    g = jnp.asarray(params["gamma"], f32).reshape(1, -1)         # (1, E+1)
    bt = jnp.asarray(params["beta"], f32).reshape(1, -1)         # (1, E+1)
    H = w1.shape[1]

    x = x_summary                                   # native dtype, no HBM upcast
    vc = jnp.asarray(visit_counts, jnp.int32)       # raw int32, no -inf-padded copy

    def vmem_bytes(tb: int) -> int:
        # 2x = default double buffering for streamed AND resident blocks.
        streamed = 2 * (_padded_tile_bytes((tb, d_in), x.dtype)
                        + _padded_tile_bytes((tb, E), jnp.int32)
                        + _padded_tile_bytes((tb, Eo), f32))
        resident = 2 * (_padded_tile_bytes((d_in, H), f32)
                        + _padded_tile_bytes((1, H), f32)
                        + _padded_tile_bytes((H, Eo), f32)
                        + 3 * _padded_tile_bytes((1, Eo), f32))
        return streamed + resident

    # Batch tiling: rows are independent -> "parallel" grid axis.  For B > 8,
    # guarantee >= 2 grid steps (v7x two-TC sharding), cap at block_b (past the
    # measured ~85% HBM-roofline knee), and shrink to the VMEM budget.
    if B <= 8:
        tb = B                                      # block dim == full array dim
    else:
        tb = min(block_b, _round_up(pl.cdiv(B, 2), 8))
        while tb > 8 and vmem_bytes(tb) > _VMEM_BUDGET:
            tb = max(8, _round_up(tb // 2, 8))
    grid = (pl.cdiv(B, tb),)

    vmem_limit = int(min(max(2 * vmem_bytes(tb), 32 * 1024 * 1024),
                         64 * 1024 * 1024))         # <= v7x physical VMEM

    kernel = pl.pallas_call(
        _routing_kernel,
        out_shape=jax.ShapeDtypeStruct((B, Eo), f32),
        grid_spec=pltpu.PrefetchScalarGridSpec(
            num_scalar_prefetch=1,                               # max_visits -> SMEM
            grid=grid,
            in_specs=[
                pl.BlockSpec((tb, d_in), lambda i, mv: (i, 0)),  # x       (streamed)
                pl.BlockSpec((tb, E),    lambda i, mv: (i, 0)),  # counts  (streamed)
                pl.BlockSpec((d_in, H),  lambda i, mv: (0, 0)),  # w1      (resident)
                pl.BlockSpec((1, H),     lambda i, mv: (0, 0)),  # b1      (resident)
                pl.BlockSpec((H, Eo),    lambda i, mv: (0, 0)),  # w2      (resident)
                pl.BlockSpec((1, Eo),    lambda i, mv: (0, 0)),  # b2 + q  (resident)
                pl.BlockSpec((1, Eo),    lambda i, mv: (0, 0)),  # LN gamma
                pl.BlockSpec((1, Eo),    lambda i, mv: (0, 0)),  # LN beta
            ],
            out_specs=pl.BlockSpec((tb, Eo), lambda i, mv: (i, 0)),
        ),
        compiler_params=pltpu.CompilerParams(
            dimension_semantics=("parallel",),
            vmem_limit_bytes=vmem_limit),
    )
    mv_arr = jnp.asarray([int(max_visits)], dtype=jnp.int32)
    return kernel(mv_arr, x, vc, w1, b1, w2, b2q, g, bt)


if __name__ == "__main__":
    B, D_IN, HID, E = 4, 32, 32, 4
    MAX_VISITS = 3

    key = jax.random.PRNGKey(0)
    ks = jax.random.split(key, 9)
    # bf16 input exercises the native-dtype streaming path (no f32 upcast in HBM).
    x = jax.random.normal(ks[0], (B, D_IN), dtype=jnp.float32).astype(jnp.bfloat16)
    visit_counts = jax.random.randint(ks[1], (B, E), 0, 6, dtype=jnp.int32)
    params = {
        "w1": 0.2 * jax.random.normal(ks[2], (HID, D_IN), dtype=jnp.float32),
        "b1": 0.1 * jax.random.normal(ks[3], (HID,), dtype=jnp.float32),
        "w2": 0.2 * jax.random.normal(ks[4], (E + 1, HID), dtype=jnp.float32),
        "b2": 0.1 * jax.random.normal(ks[5], (E + 1,), dtype=jnp.float32),
        "q": 0.1 * jax.random.normal(ks[6], (E + 1,), dtype=jnp.float32),
        "gamma": 1.0 + 0.1 * jax.random.normal(ks[7], (E + 1,), dtype=jnp.float32),
        "beta": 0.1 * jax.random.normal(ks[8], (E + 1,), dtype=jnp.float32),
    }

    out = routing_controller_forward(x, visit_counts, MAX_VISITS, params)
    out = jax.block_until_ready(out)

    # Pure-JAX reference (exact erf GELU, torch LayerNorm semantics), computed
    # from the same bf16-valued inputs upcast to f32.
    xr = x.astype(jnp.float32)
    h = jax.nn.gelu(xr @ params["w1"].T + params["b1"], approximate=False)
    logits = h @ params["w2"].T + params["b2"]
    z = logits + params["q"][None, :]
    mean = z.mean(-1, keepdims=True)
    var = ((z - mean) ** 2).mean(-1, keepdims=True)
    y = (z - mean) / jnp.sqrt(var + _LN_EPS) * params["gamma"] + params["beta"]
    y = jnp.clip(y, -10.0, 10.0)
    mask = visit_counts >= MAX_VISITS
    ext = jnp.concatenate([mask, jnp.zeros_like(mask[:, :1])], axis=-1)
    ref = jnp.where(ext, -jnp.inf, y)

    assert out.shape == (B, E + 1)
    finite = jnp.isfinite(ref)
    assert bool(jnp.all(jnp.isfinite(out) == finite)), "-inf mask pattern mismatch"
    assert bool(jnp.allclose(jnp.where(finite, out, 0.0),
                             jnp.where(finite, ref, 0.0),
                             atol=1e-4, rtol=1e-4)), "value mismatch"
    print("KERNEL_OK")
</pallas_src>

<mosaic_0001>
module attributes {stable_mosaic.version = 11 : i64} {
  func.func @_routing_kernel(%arg0: i32, %arg1: memref<1xi32, #tpu.memory_space<smem>>, %arg2: memref<4x32xbf16, #tpu.memory_space<vmem>>, %arg3: memref<4x4xi32, #tpu.memory_space<vmem>>, %arg4: memref<32x32xf32, #tpu.memory_space<vmem>>, %arg5: memref<1x32xf32, #tpu.memory_space<vmem>>, %arg6: memref<32x5xf32, #tpu.memory_space<vmem>>, %arg7: memref<1x5xf32, #tpu.memory_space<vmem>>, %arg8: memref<1x5xf32, #tpu.memory_space<vmem>>, %arg9: memref<1x5xf32, #tpu.memory_space<vmem>>, %arg10: memref<4x5xf32, #tpu.memory_space<vmem>>) attributes {dimension_semantics = [#tpu.dimension_semantics<parallel>], iteration_bounds = array<i64: 1>, scalar_prefetch = 1 : i64, scratch_operands = 0 : i64, tpu.core_type = #tpu.core_type<tc>, window_params = [{transform_indices = @transform_0, window_bounds = array<i64: 4, 32>}, {transform_indices = @transform_1, window_bounds = array<i64: 4, 4>}, {pipeline_mode = #tpu.pipeline_mode<synchronous>, transform_indices = @transform_2, window_bounds = array<i64: 32, 32>}, {pipeline_mode = #tpu.pipeline_mode<synchronous>, transform_indices = @transform_3, window_bounds = array<i64: 1, 32>}, {pipeline_mode = #tpu.pipeline_mode<synchronous>, transform_indices = @transform_4, window_bounds = array<i64: 32, 5>}, {pipeline_mode = #tpu.pipeline_mode<synchronous>, transform_indices = @transform_5, window_bounds = array<i64: 1, 5>}, {pipeline_mode = #tpu.pipeline_mode<synchronous>, transform_indices = @transform_6, window_bounds = array<i64: 1, 5>}, {pipeline_mode = #tpu.pipeline_mode<synchronous>, transform_indices = @transform_7, window_bounds = array<i64: 1, 5>}, {transform_indices = @transform_8, window_bounds = array<i64: 4, 5>}]} {
    %c0 = arith.constant 0 : index
    %c0_0 = arith.constant 0 : index
    %0 = vector.load %arg2[%c0, %c0_0] : memref<4x32xbf16, #tpu.memory_space<vmem>>, vector<4x32xbf16>
    %1 = arith.extf %0 : vector<4x32xbf16> to vector<4x32xf32>
    %c0_1 = arith.constant 0 : index
    %c0_2 = arith.constant 0 : index
    %2 = vector.load %arg4[%c0_1, %c0_2] : memref<32x32xf32, #tpu.memory_space<vmem>>, vector<32x32xf32>
    %cst = arith.constant dense<0.000000e+00> : vector<4x32xf32>
    %3 = tpu.matmul %1, %2, %cst {dimension_numbers = #tpu.dot_dimension_numbers<[1], [0], [0], [1], [0, 0, 1, 1], [], []>} : vector<4x32xf32>, vector<32x32xf32>, vector<4x32xf32> -> vector<4x32xf32>
    %c0_3 = arith.constant 0 : index
    %c0_4 = arith.constant 0 : index
    %4 = vector.load %arg5[%c0_3, %c0_4] : memref<1x32xf32, #tpu.memory_space<vmem>>, vector<1x32xf32>
    %5 = vector.broadcast %4 : vector<1x32xf32> to vector<4x32xf32>
    %6 = arith.addf %3, %5 : vector<4x32xf32>
    %cst_5 = arith.constant 5.000000e-01 : f32
    %7 = vector.broadcast %cst_5 : f32 to vector<4x32xf32>
    %8 = arith.mulf %7, %6 : vector<4x32xf32>
    %cst_6 = arith.constant 0.707106769 : f32
    %9 = vector.broadcast %cst_6 : f32 to vector<4x32xf32>
    %10 = arith.mulf %6, %9 : vector<4x32xf32>
    %11 = math.absf %10 : vector<4x32xf32>
    %cst_7 = arith.constant 0.327591091 : f32
    %12 = vector.broadcast %cst_7 : f32 to vector<4x32xf32>
    %13 = arith.mulf %12, %11 : vector<4x32xf32>
    %cst_8 = arith.constant 1.000000e+00 : f32
    %14 = vector.broadcast %cst_8 : f32 to vector<4x32xf32>
    %15 = arith.addf %14, %13 : vector<4x32xf32>
    %16 = tpu.reciprocal %15 : vector<4x32xf32> -> vector<4x32xf32>
    %cst_9 = arith.constant 1.06140542 : f32
    %17 = vector.broadcast %cst_9 : f32 to vector<4x32xf32>
    %18 = arith.mulf %17, %16 : vector<4x32xf32>
    %cst_10 = arith.constant -1.45315206 : f32
    %19 = vector.broadcast %cst_10 : f32 to vector<4x32xf32>
    %20 = arith.addf %18, %19 : vector<4x32xf32>
    %21 = arith.mulf %20, %16 : vector<4x32xf32>
    %cst_11 = arith.constant 1.42141378 : f32
    %22 = vector.broadcast %cst_11 : f32 to vector<4x32xf32>
    %23 = arith.addf %21, %22 : vector<4x32xf32>
    %24 = arith.mulf %23, %16 : vector<4x32xf32>
    %cst_12 = arith.constant -0.284496725 : f32
    %25 = vector.broadcast %cst_12 : f32 to vector<4x32xf32>
    %26 = arith.addf %24, %25 : vector<4x32xf32>
    %27 = arith.mulf %26, %16 : vector<4x32xf32>
    %cst_13 = arith.constant 0.254829586 : f32
    %28 = vector.broadcast %cst_13 : f32 to vector<4x32xf32>
    %29 = arith.addf %27, %28 : vector<4x32xf32>
    %30 = arith.mulf %29, %16 : vector<4x32xf32>
    %cst_14 = arith.constant 0.000000e+00 : f32
    %31 = vector.broadcast %cst_14 : f32 to vector<4x32xf32>
    %32 = arith.subf %31, %11 : vector<4x32xf32>
    %33 = arith.mulf %32, %11 : vector<4x32xf32>
    %34 = math.exp %33 : vector<4x32xf32>
    %35 = arith.mulf %30, %34 : vector<4x32xf32>
    %cst_15 = arith.constant 1.000000e+00 : f32
    %36 = vector.broadcast %cst_15 : f32 to vector<4x32xf32>
    %37 = arith.subf %36, %35 : vector<4x32xf32>
    %cst_16 = arith.constant 0.000000e+00 : f32
    %38 = vector.broadcast %cst_16 : f32 to vector<4x32xf32>
    %39 = arith.cmpf oge, %10, %38 : vector<4x32xf32>
    %cst_17 = arith.constant 0.000000e+00 : f32
    %40 = vector.broadcast %cst_17 : f32 to vector<4x32xf32>
    %41 = arith.subf %40, %37 : vector<4x32xf32>
    %42 = arith.select %39, %37, %41 : vector<4x32xi1>, vector<4x32xf32>
    %cst_18 = arith.constant 1.000000e+00 : f32
    %43 = vector.broadcast %cst_18 : f32 to vector<4x32xf32>
    %44 = arith.addf %43, %42 : vector<4x32xf32>
    %45 = arith.mulf %8, %44 : vector<4x32xf32>
    %c0_19 = arith.constant 0 : index
    %c0_20 = arith.constant 0 : index
    %46 = vector.load %arg6[%c0_19, %c0_20] : memref<32x5xf32, #tpu.memory_space<vmem>>, vector<32x5xf32>
    %cst_21 = arith.constant dense<0.000000e+00> : vector<4x5xf32>
    %47 = tpu.matmul %45, %46, %cst_21 {dimension_numbers = #tpu.dot_dimension_numbers<[1], [0], [0], [1], [0, 0, 1, 1], [], []>} : vector<4x32xf32>, vector<32x5xf32>, vector<4x5xf32> -> vector<4x5xf32>
    %c0_22 = arith.constant 0 : index
    %c0_23 = arith.constant 0 : index
    %48 = vector.load %arg7[%c0_22, %c0_23] : memref<1x5xf32, #tpu.memory_space<vmem>>, vector<1x5xf32>
    %49 = vector.broadcast %48 : vector<1x5xf32> to vector<4x5xf32>
    %50 = arith.addf %47, %49 : vector<4x5xf32>
    %cst_24 = arith.constant dense<0.000000e+00> : vector<4xf32>
    %51 = vector.multi_reduction <add>, %50, %cst_24 [1] : vector<4x5xf32> to vector<4xf32>
    %52 = vector.shape_cast %51 : vector<4xf32> to vector<4x1xf32>
    %cst_25 = arith.constant 5.000000e+00 : f32
    %53 = vector.broadcast %cst_25 : f32 to vector<4x1xf32>
    %54 = arith.divf %52, %53 : vector<4x1xf32>
    %55 = vector.broadcast %54 : vector<4x1xf32> to vector<4x5xf32>
    %56 = arith.subf %50, %55 : vector<4x5xf32>
    %57 = arith.mulf %56, %56 : vector<4x5xf32>
    %cst_26 = arith.constant dense<0.000000e+00> : vector<4xf32>
    %58 = vector.multi_reduction <add>, %57, %cst_26 [1] : vector<4x5xf32> to vector<4xf32>
    %59 = vector.shape_cast %58 : vector<4xf32> to vector<4x1xf32>
    %cst_27 = arith.constant 5.000000e+00 : f32
    %60 = vector.broadcast %cst_27 : f32 to vector<4x1xf32>
    %61 = arith.divf %59, %60 : vector<4x1xf32>
    %cst_28 = arith.constant 9.99999974E-6 : f32
    %62 = vector.broadcast %cst_28 : f32 to vector<4x1xf32>
    %63 = arith.addf %61, %62 : vector<4x1xf32>
    %64 = math.rsqrt %63 : vector<4x1xf32>
    %65 = vector.broadcast %64 : vector<4x1xf32> to vector<4x5xf32>
    %66 = arith.mulf %56, %65 : vector<4x5xf32>
    %c0_29 = arith.constant 0 : index
    %c0_30 = arith.constant 0 : index
    %67 = vector.load %arg8[%c0_29, %c0_30] : memref<1x5xf32, #tpu.memory_space<vmem>>, vector<1x5xf32>
    %68 = vector.broadcast %67 : vector<1x5xf32> to vector<4x5xf32>
    %69 = arith.mulf %66, %68 : vector<4x5xf32>
    %c0_31 = arith.constant 0 : index
    %c0_32 = arith.constant 0 : index
    %70 = vector.load %arg9[%c0_31, %c0_32] : memref<1x5xf32, #tpu.memory_space<vmem>>, vector<1x5xf32>
    %71 = vector.broadcast %70 : vector<1x5xf32> to vector<4x5xf32>
    %72 = arith.addf %69, %71 : vector<4x5xf32>
    %cst_33 = arith.constant -1.000000e+01 : f32
    %cst_34 = arith.constant 1.000000e+01 : f32
    %73 = vector.broadcast %cst_33 : f32 to vector<4x5xf32>
    %74 = arith.maximumf %73, %72 : vector<4x5xf32>
    %75 = vector.broadcast %cst_34 : f32 to vector<4x5xf32>
    %76 = arith.minimumf %75, %74 : vector<4x5xf32>
    %c0_35 = arith.constant 0 : index
    %c0_36 = arith.constant 0 : index
    %77 = vector.load %arg10[%c0_35, %c0_36] : memref<4x5xf32, #tpu.memory_space<vmem>>, vector<4x5xf32>
    tpu.vector_store %arg10[%c0_35, %c0_36], %76 {strides = array<i32>} : memref<4x5xf32, #tpu.memory_space<vmem>>, vector<4x5xf32>,
    %c0_37 = arith.constant 0 : index
    %c0_38 = arith.constant 0 : index
    %78 = vector.load %arg3[%c0_37, %c0_38] : memref<4x4xi32, #tpu.memory_space<vmem>>, vector<4x4xi32>
    %c0_39 = arith.constant 0 : index
    %79 = memref.load %arg1[%c0_39] : memref<1xi32, #tpu.memory_space<smem>>
    %80 = vector.broadcast %79 : i32 to vector<4x4xi32>
    %81 = arith.cmpi sge, %78, %80 : vector<4x4xi32>
    %82 = vector.extract_strided_slice %76 {offsets = [0, 0], sizes = [4, 4], strides = [1, 1]} : vector<4x5xf32> to vector<4x4xf32>
    %cst_40 = arith.constant 0xFF800000 : f32
    %83 = vector.broadcast %cst_40 : f32 to vector<4x4xf32>
    %84 = arith.select %81, %83, %82 : vector<4x4xi1>, vector<4x4xf32>
    %c0_41 = arith.constant 0 : index
    %c0_42 = arith.constant 0 : index
    %85 = vector.load %arg10[%c0_41, %c0_42] : memref<4x5xf32, #tpu.memory_space<vmem>>, vector<4x4xf32>
    tpu.vector_store %arg10[%c0_41, %c0_42], %84 {strides = array<i32>} : memref<4x5xf32, #tpu.memory_space<vmem>>, vector<4x4xf32>,
    return
  }
  func.func @transform_0(%arg0: i32, %arg1: memref<1xi32, #tpu.memory_space<smem>>) -> (i32, i32) {
    %c0_i32 = arith.constant 0 : i32
    %c0_i32_0 = arith.constant 0 : i32
    return %arg0, %c0_i32 : i32, i32
  }
  func.func @transform_1(%arg0: i32, %arg1: memref<1xi32, #tpu.memory_space<smem>>) -> (i32, i32) {
    %c0_i32 = arith.constant 0 : i32
    %c0_i32_0 = arith.constant 0 : i32
    return %arg0, %c0_i32 : i32, i32
  }
  func.func @transform_2(%arg0: i32, %arg1: memref<1xi32, #tpu.memory_space<smem>>) -> (i32, i32) {
    %c0_i32 = arith.constant 0 : i32
    %c0_i32_0 = arith.constant 0 : i32
    %c0_i32_1 = arith.constant 0 : i32
    return %c0_i32, %c0_i32_0 : i32, i32
  }
  func.func @transform_3(%arg0: i32, %arg1: memref<1xi32, #tpu.memory_space<smem>>) -> (i32, i32) {
    %c0_i32 = arith.constant 0 : i32
    %c0_i32_0 = arith.constant 0 : i32
    %c0_i32_1 = arith.constant 0 : i32
    return %c0_i32, %c0_i32_0 : i32, i32
  }
  func.func @transform_4(%arg0: i32, %arg1: memref<1xi32, #tpu.memory_space<smem>>) -> (i32, i32) {
    %c0_i32 = arith.constant 0 : i32
    %c0_i32_0 = arith.constant 0 : i32
    %c0_i32_1 = arith.constant 0 : i32
    return %c0_i32, %c0_i32_0 : i32, i32
  }
  func.func @transform_5(%arg0: i32, %arg1: memref<1xi32, #tpu.memory_space<smem>>) -> (i32, i32) {
    %c0_i32 = arith.constant 0 : i32
    %c0_i32_0 = arith.constant 0 : i32
    %c0_i32_1 = arith.constant 0 : i32
    return %c0_i32, %c0_i32_0 : i32, i32
  }
  func.func @transform_6(%arg0: i32, %arg1: memref<1xi32, #tpu.memory_space<smem>>) -> (i32, i32) {
    %c0_i32 = arith.constant 0 : i32
    %c0_i32_0 = arith.constant 0 : i32
    %c0_i32_1 = arith.constant 0 : i32
    return %c0_i32, %c0_i32_0 : i32, i32
  }
  func.func @transform_7(%arg0: i32, %arg1: memref<1xi32, #tpu.memory_space<smem>>) -> (i32, i32) {
    %c0_i32 = arith.constant 0 : i32
    %c0_i32_0 = arith.constant 0 : i32
    %c0_i32_1 = arith.constant 0 : i32
    return %c0_i32, %c0_i32_0 : i32, i32
  }
  func.func @transform_8(%arg0: i32, %arg1: memref<1xi32, #tpu.memory_space<smem>>) -> (i32, i32) {
    %c0_i32 = arith.constant 0 : i32
    %c0_i32_0 = arith.constant 0 : i32
    return %arg0, %c0_i32 : i32, i32
  }
}

</mosaic_0001>

<llo_original>
// kernel: tpu_custom_call.1
$region0: #{tpu_custom_call.1}
  #allocation0 [shape = 'u32[]', space=smem, size = 0x4, offset = 0x4, fixed_abs, tag = 'smem constant byte address 0x4 - core index']
  #allocation1 [shape = 'u32[144,128]{1,0:T(1,128)}', space=vmem, size = 0x12000, scoped, tag = 'internal scratch']
  #allocation2 [shape = 's32[1]{0}', space=sflag, size = 0x4, scoped, tag = 'scoped memory for tpu_custom_call.1']
  #allocation3 [shape = 's32[1]{0:T(128)S(6)}', space=smem, size = 0x200, scoped, tag = 'prefetched SMEM operand 0']
  %s0 = inlined_call_operand.<no memory space> [shape: s32[1], index: 0, kind: input, shape index: {}]
  %s1 = inlined_call_operand.vmem [shape: bf16[4,32], index: 1, kind: input, shape index: {}]
  %s2 = inlined_call_operand.vmem [shape: s32[4,4], index: 2, kind: input, shape index: {}]
  %s3 = inlined_call_operand.vmem [shape: f32[32,32], index: 3, kind: input, shape index: {}]
  %s4 = inlined_call_operand.vmem [shape: f32[1,32], index: 4, kind: input, shape index: {}]
  %s5 = inlined_call_operand.vmem [shape: f32[32,5], index: 5, kind: input, shape index: {}]
  %s6 = inlined_call_operand.vmem [shape: f32[1,5], index: 6, kind: input, shape index: {}]
  %s7 = inlined_call_operand.vmem [shape: f32[1,5], index: 7, kind: input, shape index: {}]
  %s8 = inlined_call_operand.vmem [shape: f32[1,5], index: 8, kind: input, shape index: {}]
  %s9 = inlined_call_operand.hbm [shape: f32[4,5], index: 9, kind: output, shape index: {}]
  %s10 = sld [smem:[#allocation0]]
  $region42: #{tpu_custom_call.1} parent=0
    _
  %s12 = ssub.s32 1, %s10
  %s13 = scalar_select 0, %s12, %s10
  %14 = sst [smem:[#allocation3]] %s0
  $region1: #{tpu_custom_call.1} parent=0
    #allocation4 [shape = 'u8[2048]{0}', space=vmem, size = 0x800, scoped, tag = 'output window, operand 0, single buffered']
    #allocation5 [shape = 's32[1]{0}', space=sflag, size = 0x4, scoped, tag = 'scoped memory for tpu_custom_call.1']
    %15 = vsyncpa [#allocation5], 0
    // Predicated region
    $region2: #{tpu_custom_call.1} parent=1 // pred_check
      _
    $region3: #{tpu_custom_call.1} parent=1 // pred_check_branch
      %17 = sbr.rel (0) target = $region5
    $region4: #{tpu_custom_call.1} parent=1 // pred_region
      _
    $region5: #{tpu_custom_call.1} parent=1 // pred_fallthru
      _
    // Predicated region
    $region6: #{tpu_custom_call.1} parent=1 // pred_check
      _
    $region7: #{tpu_custom_call.1} parent=1 // pred_check_branch
      %19 = sbr.rel (0) target = $region9
    $region8: #{tpu_custom_call.1} parent=1 // pred_region
      _
    $region9: #{tpu_custom_call.1} parent=1 // pred_fallthru
      _
    // Predicated region
    $region10: #{tpu_custom_call.1} parent=1 // pred_check
      _
    $region11: #{tpu_custom_call.1} parent=1 // pred_check_branch
      %21 = sbr.rel (0) target = $region13
    $region12: #{tpu_custom_call.1} parent=1 // pred_region
      _
    $region13: #{tpu_custom_call.1} parent=1 // pred_fallthru
      _
    // Predicated region
    $region14: #{tpu_custom_call.1} parent=1 // pred_check
      _
    $region15: #{tpu_custom_call.1} parent=1 // pred_check_branch
      %23 = sbr.rel (0) target = $region17
    $region16: #{tpu_custom_call.1} parent=1 // pred_region
      _
    $region17: #{tpu_custom_call.1} parent=1 // pred_fallthru
      _
    // Predicated region
    $region18: #{tpu_custom_call.1} parent=1 // pred_check
      _
    $region19: #{tpu_custom_call.1} parent=1 // pred_check_branch
      %25 = sbr.rel (0) target = $region21
    $region20: #{tpu_custom_call.1} parent=1 // pred_region
      _
    $region21: #{tpu_custom_call.1} parent=1 // pred_fallthru
      _
    // Predicated region
    $region22: #{tpu_custom_call.1} parent=1 // pred_check
      _
    $region23: #{tpu_custom_call.1} parent=1 // pred_check_branch
      %27 = sbr.rel (0) target = $region25
    $region24: #{tpu_custom_call.1} parent=1 // pred_region
      _
    $region25: #{tpu_custom_call.1} parent=1 // pred_fallthru
      _
    // Predicated region
    $region26: #{tpu_custom_call.1} parent=1 // pred_check
      _
    $region27: #{tpu_custom_call.1} parent=1 // pred_check_branch
      %29 = sbr.rel (0) target = $region29
    $region28: #{tpu_custom_call.1} parent=1 // pred_region
      _
    $region29: #{tpu_custom_call.1} parent=1 // pred_fallthru
      _
    // Predicated region
    $region30: #{tpu_custom_call.1} parent=1 // pred_check
      _
    $region31: #{tpu_custom_call.1} parent=1 // pred_check_branch
      %31 = sbr.rel (0) target = $region33
    $region32: #{tpu_custom_call.1} parent=1 // pred_region
      _
    $region33: #{tpu_custom_call.1} parent=1 // pred_fallthru
      _
    %v32 = vld [vmem:[%s1] sm:$0x3]
    %v33 = vunpack.c.l.bf16 %v32
    %v34 = vld [vmem:[%s3] sm:$0xff]
    %v35 = vld [vmem:[%s3 + $0x8] sm:$0xff]
    %v36 = vld [vmem:[%s3 + $0x10] sm:$0xff]
    %v37 = vld [vmem:[%s3 + $0x18] sm:$0xff]
    %v38 = vld [vmem:[%s4] sm:$0x1]
    %v40 = vlaneseq
    %v41 = vshrl.u32 %v40, 7
    %v42 = vsub.s32 0, %v41
    %v43 = vrot.slane %v38, %v42
    %vm45 = vcmask 261120
    %v47 = vsel %vm45, %v33, 0
    %49 = vmatprep.subr.mxu0 0.0
    %50 = vmatpush1.msra.mxu0 0.0
    %51 = vmatprep.subr.mxu0 0.0
    %52 = vmatpush1.msra.mxu0 0.0
    %53 = vmatprep.subr.mxu0 0.0
    %54 = vmatpush1.msra.mxu0 0.0
    %55 = vmatprep.subr.mxu0 0.0
    %56 = vmatpush1.msra.mxu0 0.0
    %57 = vmatprep.subr.mxu0 0.0
    %58 = vmatpush1.msra.mxu0 0.0
    %59 = vmatprep.subr.mxu0 0.0
    %60 = vmatpush1.msra.mxu0 0.0
    %61 = vmatprep.subr.mxu0 0.0
    %62 = vmatpush1.msra.mxu0 0.0
    %63 = vmatprep.subr.mxu0 0.0
    %64 = vmatpush1.msra.mxu0 0.0
    %65 = vmatprep.subr.mxu0 0.0
    %66 = vmatpush1.msra.mxu0 0.0
    %67 = vmatprep.subr.mxu0 0.0
    %68 = vmatpush1.msra.mxu0 0.0
    %69 = vmatprep.subr.mxu0 0.0
    %70 = vmatpush1.msra.mxu0 0.0
    %71 = vmatprep.subr.mxu0 0.0
    %72 = vmatpush1.msra.mxu0 0.0
    %73 = vmatprep.subr.mxu0 0.0
    %74 = vmatpush1.msra.mxu0 %v37
    %75 = vmatprep.subr.mxu0 0.0
    %76 = vmatpush1.msra.mxu0 %v36
    %77 = vmatprep.subr.mxu0 0.0
    %78 = vmatpush1.msra.mxu0 %v35
    %79 = vmatprep.subr.mxu0 0.0
    %80 = vmatpush1.msra.mxu0 %v34
    %81 = vmatprep.subr.mxu0 0.0
    %82 = vmatpush2.msra.mxu0 0.0
    %83 = vmatprep.subr.mxu0 0.0
    %84 = vmatpush2.msra.mxu0 0.0
    %85 = vmatprep.subr.mxu0 0.0
    %86 = vmatpush2.msra.mxu0 0.0
    %87 = vmatprep.subr.mxu0 0.0
    %88 = vmatpush2.msra.mxu0 0.0
    %89 = vmatprep.subr.mxu0 0.0
    %90 = vmatpush2.msra.mxu0 0.0
    %91 = vmatprep.subr.mxu0 0.0
    %92 = vmatpush2.msra.mxu0 0.0
    %93 = vmatprep.subr.mxu0 0.0
    %94 = vmatpush2.msra.mxu0 0.0
    %95 = vmatprep.subr.mxu0 0.0
    %96 = vmatpush2.msra.mxu0 0.0
    %97 = vmatprep.subr.mxu0 0.0
    %98 = vmatpush2.msra.mxu0 0.0
    %99 = vmatprep.subr.mxu0 0.0
    %100 = vmatpush2.msra.mxu0 0.0
    %101 = vmatprep.subr.mxu0 0.0
    %102 = vmatpush2.msra.mxu0 0.0
    %103 = vmatprep.subr.mxu0 0.0
    %104 = vmatpush2.msra.mxu0 0.0
    %105 = vmatprep.subr.mxu0 0.0
    %106 = vmatpush2.msra.mxu0 0.0
    %107 = vmatprep.subr.mxu0 0.0
    %108 = vmatpush2.msra.mxu0 0.0
    %109 = vmatprep.subr.mxu0 0.0
    %110 = vmatpush2.msra.mxu0 0.0
    %111 = vmatprep.subr.mxu0 0.0
    %112 = vmatpush2.msra.mxu0 0.0
    %113 = vmatprep.mubr.f32.mxu0 0.0
    %114 = vmatmul.mubr.f32.gmra.mxu0 %v47
    %v115 = vpop.f32.mrf.mxu0
    %v116 = vadd.f32 %v43, %v115
    %v117 = vpop.f32.mrf.mxu0
    %118 = vdwg.mxu0
    %v119 = vmul.f32 %v116, 0.5
    %v120 = vmul.f32 %v116, 0.70710677
    %v121 = vand.u32 2147483647, %v120
    %v122 = vmul.f32 %v121, 0.3275911
    %v123 = vadd.f32 %v122, 1.0
    %v124 = vrcp.pop %v123
    %v125 = vmul.f32 %v124, 1.0614054
    %v126 = vadd.f32 %v125, -1.4531521
    %v127 = vmul.f32 %v126, %v124
    %v128 = vadd.f32 %v127, 1.4214138
    %v129 = vmul.f32 %v128, %v124
    %v130 = vadd.f32 %v129, -0.28449672
    %v131 = vmul.f32 %v130, %v124
    %v132 = vadd.f32 %v131, 0.2548296
    %v133 = vmul.f32 %v132, %v124
    %v134 = vsub.f32 0.0, %v121
    %v135 = vmul.f32 %v134, %v121
    %v136 = vmul.f32 %v135, 1.442695
    %v137 = vpow.pop %v136
    %v138 = vmul.f32 %v133, %v137
    %v139 = vsub.f32 1.0, %v138
    %vm140 = vcmp.ge.f32.partialorder %v120, 0.0
    %v141 = vsub.f32 0.0, %v139
    %v142 = vsel %vm140, %v139, %v141
    %v143 = vadd.f32 %v142, 1.0
    %v144 = vmul.f32 %v119, %v143
    %v145 = vld [vmem:[%s5] sm:$0xff]
    %v146 = vld [vmem:[%s5 + $0x8] sm:$0xff]
    %v147 = vld [vmem:[%s5 + $0x10] sm:$0xff]
    %v148 = vld [vmem:[%s5 + $0x18] sm:$0xff]
    %v149 = vld [vmem:[%s6] sm:$0x1]
    %v151 = vlaneseq
    %v152 = vshrl.u32 %v151, 7
    %v153 = vsub.s32 0, %v152
    %v154 = vrot.slane %v149, %v153
    %v157 = vsel %vm45, %v144, 0
    %159 = vmatprep.subr.mxu0 0.0
    %160 = vmatpush1.msra.mxu0 0.0
    %161 = vmatprep.subr.mxu0 0.0
    %162 = vmatpush1.msra.mxu0 0.0
    %163 = vmatprep.subr.mxu0 0.0
    %164 = vmatpush1.msra.mxu0 0.0
    %165 = vmatprep.subr.mxu0 0.0
    %166 = vmatpush1.msra.mxu0 0.0
    %167 = vmatprep.subr.mxu0 0.0
    %168 = vmatpush1.msra.mxu0 0.0
    %169 = vmatprep.subr.mxu0 0.0
    %170 = vmatpush1.msra.mxu0 0.0
    %171 = vmatprep.subr.mxu0 0.0
    %172 = vmatpush1.msra.mxu0 0.0
    %173 = vmatprep.subr.mxu0 0.0
    %174 = vmatpush1.msra.mxu0 0.0
    %175 = vmatprep.subr.mxu0 0.0
    %176 = vmatpush1.msra.mxu0 0.0
    %177 = vmatprep.subr.mxu0 0.0
    %178 = vmatpush1.msra.mxu0 0.0
    %179 = vmatprep.subr.mxu0 0.0
    %180 = vmatpush1.msra.mxu0 0.0
    %181 = vmatprep.subr.mxu0 0.0
    %182 = vmatpush1.msra.mxu0 0.0
    %183 = vmatprep.subr.mxu0 0.0
    %184 = vmatpush1.msra.mxu0 %v148
    %185 = vmatprep.subr.mxu0 0.0
    %186 = vmatpush1.msra.mxu0 %v147
    %187 = vmatprep.subr.mxu0 0.0
    %188 = vmatpush1.msra.mxu0 %v146
    %189 = vmatprep.subr.mxu0 0.0
    %190 = vmatpush1.msra.mxu0 %v145
    %191 = vmatprep.subr.mxu0 0.0
    %192 = vmatpush2.msra.mxu0 0.0
    %193 = vmatprep.subr.mxu0 0.0
    %194 = vmatpush2.msra.mxu0 0.0
    %195 = vmatprep.subr.mxu0 0.0
    %196 = vmatpush2.msra.mxu0 0.0
    %197 = vmatprep.subr.mxu0 0.0
    %198 = vmatpush2.msra.mxu0 0.0
    %199 = vmatprep.subr.mxu0 0.0
    %200 = vmatpush2.msra.mxu0 0.0
    %201 = vmatprep.subr.mxu0 0.0
    %202 = vmatpush2.msra.mxu0 0.0
    %203 = vmatprep.subr.mxu0 0.0
    %204 = vmatpush2.msra.mxu0 0.0
    %205 = vmatprep.subr.mxu0 0.0
    %206 = vmatpush2.msra.mxu0 0.0
    %207 = vmatprep.subr.mxu0 0.0
    %208 = vmatpush2.msra.mxu0 0.0
    %209 = vmatprep.subr.mxu0 0.0
    %210 = vmatpush2.msra.mxu0 0.0
    %211 = vmatprep.subr.mxu0 0.0
    %212 = vmatpush2.msra.mxu0 0.0
    %213 = vmatprep.subr.mxu0 0.0
    %214 = vmatpush2.msra.mxu0 0.0
    %215 = vmatprep.subr.mxu0 0.0
    %216 = vmatpush2.msra.mxu0 0.0
    %217 = vmatprep.subr.mxu0 0.0
    %218 = vmatpush2.msra.mxu0 0.0
    %219 = vmatprep.subr.mxu0 0.0
    %220 = vmatpush2.msra.mxu0 0.0
    %221 = vmatprep.subr.mxu0 0.0
    %222 = vmatpush2.msra.mxu0 0.0
    %223 = vmatprep.mubr.f32.mxu0 0.0
    %224 = vmatmul.mubr.f32.gmra.mxu0 %v157
    %v225 = vpop.f32.mrf.mxu0
    %v226 = vadd.f32 %v154, %v225
    %v227 = vpop.f32.mrf.mxu0
    %228 = vdwg.mxu0
    %vm229 = vcmask 35840
    %v230 = vsel %vm229, %v226, 0.0
    %231 = vadd.xlane.f32.xlu0 %v230
    %v232 = vpop.xlane.xlu0 %231
    %v233 = vrcp.pop 5.0
    %v234 = vmul.f32 %v232, %v233
    %v235 = vsub.f32 %v226, %v234
    %v236 = vmul.f32 %v235, %v235
    %v237 = vsel %vm229, %v236, 0.0
    %238 = vadd.xlane.f32.xlu0 %v237
    %v239 = vpop.xlane.xlu0 %238
    %v240 = vmul.f32 %v239, %v233
    %v241 = vadd.f32 %v240, 1e-05
    %v242 = vrsqrt.pop %v241
    %v243 = vmul.f32 %v235, %v242
    %v244 = vld [vmem:[%s7] sm:$0x1]
    %v246 = vlaneseq
    %v247 = vshrl.u32 %v246, 7
    %v248 = vsub.s32 0, %v247
    %v249 = vrot.slane %v244, %v248
    %v251 = vmul.f32 %v243, %v249
    %v252 = vld [vmem:[%s8] sm:$0x1]
    %v254 = vlaneseq
    %v255 = vshrl.u32 %v254, 7
    %v256 = vsub.s32 0, %v255
    %v257 = vrot.slane %v252, %v256
    %v259 = vadd.f32 %v251, %v257
    %v260 = vmax.f32 %v259, -10.0
    %v261 = vmin.f32 %v260, 10.0
    %262 = vst.msk [vmem:[#allocation4] sm:$0xf] %vm229, %v261
    %v263 = vld [vmem:[%s2] sm:$0xf]
    %s264 = sld [smem:[#allocation3]]
    %v265 = vstv %s264
    %vm266 = vcmp.ge.s32.totalorder %v263, %v265
    %v267 = vsel %vm266, -inf, %v261
    %vm268 = vcmask 27648
    %269 = vst.msk [vmem:[#allocation4] sm:$0xf] %vm268, %v267
    // Predicated region
    $region34: #{tpu_custom_call.1} parent=1 // pred_check
      _
    $region35: #{tpu_custom_call.1} parent=1 // pred_check_branch
      %271 = sbr.rel (0) target = $region37
    $region36: #{tpu_custom_call.1} parent=1 // pred_region
      %s273 = ssub.s32 64, 64
      %274 = vsyncadd [#allocation5], %s273
      %s276 = sshll.u32 [#allocation4], 4
      %s277 = int_to_ptr.vmem [resolvable:$true] %s276
      %279 = dma.vmem_to_hbm [thread:$0]  %s277, 64, %s9, [#allocation5]
    $region37: #{tpu_custom_call.1} parent=1 // pred_fallthru
      _
    // Predicated region
    $region38: #{tpu_custom_call.1} parent=1 // pred_check
      _
    $region39: #{tpu_custom_call.1} parent=1 // pred_check_branch
      %281 = sbr.rel (0) target = $region41
    $region40: #{tpu_custom_call.1} parent=1 // pred_region
      %282 = dma.done [#allocation5], 64
    $region41: #{tpu_custom_call.1} parent=1 // pred_fallthru
      _
    %283 = vsyncpa [#allocation5], 1

</llo_original>
